<compile_context>
chip_gen: v7x
topology: tpu7x:2x2x1
jax: 0.10.0
libtpu: 0.0.40
codegen_flags: <defaults>
</compile_context>

<pallas_src>
import functools
import math

import jax
import jax.numpy as jnp
from jax.experimental import pallas as pl
from jax.experimental.pallas import tpu as pltpu

_LANE = 128
_NEG_INF = -1e30  # pad-lane bias for the distributional head (f32 exp -> 0)


def _round_up(x, m):
    return (x + m - 1) // m * m


def _choose_tile(batch, max_tile_b):
    """Lane-aligned batch tiling with >= 2 grid steps when possible (v7x TCs)."""
    b_pad0 = _round_up(batch, 8)
    tile_b = _round_up(pl.cdiv(b_pad0, 2), _LANE)        # target: 2 grid steps
    tile_b = min(tile_b, _round_up(max_tile_b, _LANE))   # cap for huge batches
    if tile_b >= b_pad0:   # batch too small to split into two 128-aligned tiles
        tile_b = b_pad0
    b_pad = _round_up(b_pad0, tile_b)
    return tile_b, b_pad


# ----------------------------------------------------------------------------
# Pallas kernels
# ----------------------------------------------------------------------------
def _q_kernel_t(xt_ref, w1t_ref, b1t_ref, w2t_ref, b2t_ref, w3t_ref, b3t_ref,
                out_ref):
    """Non-distributional head, feature-major: out (8, tile_b) = MLP(x).T (padded).

    Layer 1 (K=4) is done as 4 VPU FMAs in f32; layers 2/3 are bf16 MXU dots
    with f32 accumulation. The Q head is padded from 2 to 8 rows so all
    operands/stores are >= 8 sublanes and the output store is lane-dense.
    """
    xt = xt_ref[...]                       # (4, tile_b) f32
    w1t = w1t_ref[...]                     # (64, 4) f32
    h = b1t_ref[...]                       # (64, 1)  -> broadcasts over lanes
    h = h + w1t[:, 0:1] * xt[0:1, :]
    h = h + w1t[:, 1:2] * xt[1:2, :]
    h = h + w1t[:, 2:3] * xt[2:3, :]
    h = h + w1t[:, 3:4] * xt[3:4, :]
    h = jnp.maximum(h, 0.0)                # (64, tile_b) f32

    h = jnp.dot(w2t_ref[...], h.astype(jnp.bfloat16),
                preferred_element_type=jnp.float32) + b2t_ref[...]
    h = jnp.maximum(h, 0.0)                # (64, tile_b) f32

    y = jnp.dot(w3t_ref[...], h.astype(jnp.bfloat16),
                preferred_element_type=jnp.float32) + b3t_ref[...]
    out_ref[...] = y.astype(out_ref.dtype)  # (8, tile_b) lane-dense store


def _dist_kernel(slot, x_ref, w1_ref, b1_ref, w2_ref, b2_ref, w3_ref, b3_ref,
                 out_ref):
    """Distributional head, batch-major: softmax over atoms per action.

    The head is lane-aligned: action 0 occupies lanes [0, slot), action 1
    lanes [slot, 2*slot), slot a multiple of 128. Pad lanes carry a -1e30 bias
    so exp() -> 0 and they vanish from the softmax. Normalization uses an
    exact divide on the (tile_b, 1) denominator (sum-to-1 holds to f32/bf16
    rounding). Output is stored bf16 to halve HBM writeback.
    """
    x = x_ref[...]                         # (tile_b, 4) f32
    w1 = w1_ref[...]                       # (4, 64) f32
    h = b1_ref[...]                        # (1, 64)
    h = h + x[:, 0:1] * w1[0:1, :]
    h = h + x[:, 1:2] * w1[1:2, :]
    h = h + x[:, 2:3] * w1[2:3, :]
    h = h + x[:, 3:4] * w1[3:4, :]
    h = jnp.maximum(h, 0.0)                # (tile_b, 64) f32

    h = jnp.dot(h.astype(jnp.bfloat16), w2_ref[...],
                preferred_element_type=jnp.float32) + b2_ref[...]
    h = jnp.maximum(h, 0.0)

    y = jnp.dot(h.astype(jnp.bfloat16), w3_ref[...],
                preferred_element_type=jnp.float32) + b3_ref[...]  # (tile_b, 2*slot)

    def _softmax(z):
        m = jnp.max(z, axis=-1, keepdims=True)
        e = jnp.exp(z - m)                           # pad lanes -> exactly 0
        s = jnp.sum(e, axis=-1, keepdims=True)
        return e * (1.0 / s)                         # exact divide, (tile_b,1) only

    out_ref[:, :slot] = _softmax(y[:, :slot]).astype(out_ref.dtype)
    out_ref[:, slot:] = _softmax(y[:, slot:]).astype(out_ref.dtype)


# ----------------------------------------------------------------------------
# Parameter construction (deterministic NoisyLinear collapse)
# ----------------------------------------------------------------------------
def _noisy_linear_params(key, in_f, out_f, std_init):
    """Effective (W [in,out], b [1,out]) with one fixed factorized-noise sample."""
    k_mu_w, k_mu_b, k_eps_in, k_eps_out = jax.random.split(key, 4)
    bound = 1.0 / math.sqrt(in_f)
    w_mu = jax.random.uniform(k_mu_w, (in_f, out_f), jnp.float32, -bound, bound)
    b_mu = jax.random.uniform(k_mu_b, (out_f,), jnp.float32, -bound, bound)
    w_sigma = jnp.full((in_f, out_f), std_init / math.sqrt(in_f), jnp.float32)
    b_sigma = jnp.full((out_f,), std_init / math.sqrt(out_f), jnp.float32)

    def f(x):
        return jnp.sign(x) * jnp.sqrt(jnp.abs(x))

    eps_in = f(jax.random.normal(k_eps_in, (in_f,), jnp.float32))
    eps_out = f(jax.random.normal(k_eps_out, (out_f,), jnp.float32))
    w = w_mu + w_sigma * jnp.outer(eps_in, eps_out)   # (in, out)
    b = b_mu + b_sigma * eps_out
    return w, b.reshape(1, out_f)


def make_cartpole_params(key, use_distributional=False, n_atoms=None, std_init=0.5):
    out_dim = 2 * n_atoms if use_distributional else 2
    k1, k2, k3 = jax.random.split(key, 3)
    w1, b1 = _noisy_linear_params(k1, 4, 64, std_init)
    w2, b2 = _noisy_linear_params(k2, 64, 64, std_init)
    w3, b3 = _noisy_linear_params(k3, 64, out_dim, std_init)
    return (w1, b1, w2, b2, w3, b3)


# ----------------------------------------------------------------------------
# Wrapper
# ----------------------------------------------------------------------------
def cartpole_forward(x, params, use_distributional=False, n_atoms=None,
                     max_tile_b=2048):
    """x: (B, 4) float32 -> (B, 2) or (B, 2, n_atoms) float32."""
    w1, b1, w2, b2, w3, b3 = params
    B = x.shape[0]
    tile_b, b_pad = _choose_tile(B, max_tile_b)
    if b_pad != B:
        x = jnp.pad(x, ((0, b_pad - B), (0, 0)))
    grid = (b_pad // tile_b,)
    const = lambda i: (0, 0)   # weights & biases VMEM-resident across the grid
    cparams = pltpu.CompilerParams(dimension_semantics=("parallel",))

    if use_distributional:
        # Lane-align the head: each action's atom block starts on a 128-lane
        # boundary. Pad weight columns are 0, pad biases are -1e30 (f32).
        slot = _round_up(n_atoms, _LANE)
        out_dim = 2 * slot
        w3p = jnp.zeros((w3.shape[0], out_dim), jnp.float32)
        w3p = w3p.at[:, :n_atoms].set(w3[:, :n_atoms])
        w3p = w3p.at[:, slot:slot + n_atoms].set(w3[:, n_atoms:])
        b3p = jnp.full((1, out_dim), _NEG_INF, jnp.float32)
        b3p = b3p.at[:, :n_atoms].set(b3[:, :n_atoms])
        b3p = b3p.at[:, slot:slot + n_atoms].set(b3[:, n_atoms:])

        y = pl.pallas_call(
            functools.partial(_dist_kernel, slot),
            out_shape=jax.ShapeDtypeStruct((b_pad, out_dim), jnp.bfloat16),
            grid=grid,
            in_specs=[
                pl.BlockSpec((tile_b, 4), lambda i: (i, 0)),
                pl.BlockSpec((4, 64), const),
                pl.BlockSpec((1, 64), const),
                pl.BlockSpec((64, 64), const),
                pl.BlockSpec((1, 64), const),
                pl.BlockSpec((64, out_dim), const),
                pl.BlockSpec((1, out_dim), const),
            ],
            out_specs=pl.BlockSpec((tile_b, out_dim), lambda i: (i, 0)),
            compiler_params=cparams,
        )(x, w1, b1, w2.astype(jnp.bfloat16), b2,
          w3p.astype(jnp.bfloat16), b3p)
        y = y[:B].astype(jnp.float32).reshape(B, 2, slot)[:, :, :n_atoms]
        return y

    # Non-distributional Q head: feature-major so the output is a lane-dense
    # (8, B) slab (2 real Q rows + 6 zero pad rows).
    head = 8
    xt = x.T                                             # (4, b_pad) f32
    w1t = w1.T                                           # (64, 4) f32 (VPU FMA)
    b1t = b1.reshape(-1, 1)                              # (64, 1) f32
    w2t = w2.T.astype(jnp.bfloat16)                      # (64, 64) bf16
    b2t = b2.reshape(-1, 1)                              # (64, 1) f32
    w3t = jnp.zeros((head, 64), jnp.float32).at[:2].set(w3.T).astype(jnp.bfloat16)
    b3t = jnp.zeros((head, 1), jnp.float32).at[:2].set(b3.reshape(-1, 1))

    y = pl.pallas_call(
        _q_kernel_t,
        out_shape=jax.ShapeDtypeStruct((head, b_pad), jnp.float32),
        grid=grid,
        in_specs=[
            pl.BlockSpec((4, tile_b), lambda i: (0, i)),
            pl.BlockSpec((64, 4), const),
            pl.BlockSpec((64, 1), const),
            pl.BlockSpec((64, 64), const),
            pl.BlockSpec((64, 1), const),
            pl.BlockSpec((head, 64), const),
            pl.BlockSpec((head, 1), const),
        ],
        out_specs=pl.BlockSpec((head, tile_b), lambda i: (0, i)),
        compiler_params=cparams,
    )(xt, w1t, b1t, w2t, b2t, w3t, b3t)
    return y[:2, :B].T                                   # (B, 2) f32


# Pure-JAX f32 reference for validation.
def cartpole_reference(x, params, use_distributional=False, n_atoms=None):
    w1, b1, w2, b2, w3, b3 = params
    h = jnp.maximum(x @ w1 + b1, 0.0)
    h = jnp.maximum(h @ w2 + b2, 0.0)
    y = h @ w3 + b3
    if use_distributional:
        y = jax.nn.softmax(y.reshape(-1, 2, n_atoms), axis=-1)
    return y


if __name__ == "__main__":
    key = jax.random.PRNGKey(0)
    k_x, k_p1, k_p2 = jax.random.split(key, 3)

    # --- non-distributional Q head: single-tile and multi-tile batches ---
    params = make_cartpole_params(k_p1, use_distributional=False, std_init=0.5)
    for B in (8, 300):   # 8 -> one tile; 300 -> two 256-row tiles (padded to 512)
        x = jax.random.normal(k_x, (B, 4), jnp.float32)   # CartPole obs: 4 features
        y = jax.block_until_ready(cartpole_forward(x, params, use_distributional=False))
        y_ref = cartpole_reference(x, params, use_distributional=False)
        assert y.shape == (B, 2)
        # bf16 MXU operands in layers 2/3 -> a few-percent tolerance vs f32 ref.
        assert jnp.allclose(y, y_ref, atol=5e-2, rtol=5e-2), float(
            jnp.max(jnp.abs(y - y_ref)))

    # --- distributional head: padding + even 2-step grid (dual-TC on v7x) ---
    n_atoms = 51
    Bd = 300
    xd = jax.random.normal(k_x, (Bd, 4), jnp.float32)
    params_d = make_cartpole_params(k_p2, use_distributional=True,
                                    n_atoms=n_atoms, std_init=0.5)
    yd = jax.block_until_ready(
        cartpole_forward(xd, params_d, use_distributional=True, n_atoms=n_atoms))
    yd_ref = cartpole_reference(xd, params_d, use_distributional=True,
                                n_atoms=n_atoms)
    assert yd.shape == (Bd, 2, n_atoms)
    # bf16 matmul operands + bf16 output -> loosened elementwise tolerance.
    assert jnp.allclose(yd, yd_ref, atol=2e-2, rtol=5e-2), float(
        jnp.max(jnp.abs(yd - yd_ref)))
    # Exact in-kernel normalization: sums differ from 1 only by bf16 output
    # rounding (<~2e-3 worst case).
    assert jnp.allclose(jnp.sum(yd, axis=-1), 1.0, atol=1e-2)

    print("KERNEL_OK")
</pallas_src>

<mosaic_0001>
module attributes {stable_mosaic.version = 11 : i64} {
  func.func @_q_kernel_t(%arg0: i32, %arg1: memref<4x8xf32, #tpu.memory_space<vmem>>, %arg2: memref<64x4xf32, #tpu.memory_space<vmem>>, %arg3: memref<64x1xf32, #tpu.memory_space<vmem>>, %arg4: memref<64x64xbf16, #tpu.memory_space<vmem>>, %arg5: memref<64x1xf32, #tpu.memory_space<vmem>>, %arg6: memref<8x64xbf16, #tpu.memory_space<vmem>>, %arg7: memref<8x1xf32, #tpu.memory_space<vmem>>, %arg8: memref<8x8xf32, #tpu.memory_space<vmem>>) attributes {dimension_semantics = [#tpu.dimension_semantics<parallel>], iteration_bounds = array<i64: 1>, scalar_prefetch = 0 : i64, scratch_operands = 0 : i64, tpu.core_type = #tpu.core_type<tc>, window_params = [{transform_indices = @transform_0, window_bounds = array<i64: 4, 8>}, {pipeline_mode = #tpu.pipeline_mode<synchronous>, transform_indices = @transform_1, window_bounds = array<i64: 64, 4>}, {pipeline_mode = #tpu.pipeline_mode<synchronous>, transform_indices = @transform_2, window_bounds = array<i64: 64, 1>}, {pipeline_mode = #tpu.pipeline_mode<synchronous>, transform_indices = @transform_3, window_bounds = array<i64: 64, 64>}, {pipeline_mode = #tpu.pipeline_mode<synchronous>, transform_indices = @transform_4, window_bounds = array<i64: 64, 1>}, {pipeline_mode = #tpu.pipeline_mode<synchronous>, transform_indices = @transform_5, window_bounds = array<i64: 8, 64>}, {pipeline_mode = #tpu.pipeline_mode<synchronous>, transform_indices = @transform_6, window_bounds = array<i64: 8, 1>}, {transform_indices = @transform_7, window_bounds = array<i64: 8, 8>}]} {
    %c0 = arith.constant 0 : index
    %c0_0 = arith.constant 0 : index
    %0 = vector.load %arg1[%c0, %c0_0] : memref<4x8xf32, #tpu.memory_space<vmem>>, vector<4x8xf32>
    %c0_1 = arith.constant 0 : index
    %c0_2 = arith.constant 0 : index
    %1 = vector.load %arg2[%c0_1, %c0_2] : memref<64x4xf32, #tpu.memory_space<vmem>>, vector<64x4xf32>
    %c0_3 = arith.constant 0 : index
    %c0_4 = arith.constant 0 : index
    %2 = vector.load %arg3[%c0_3, %c0_4] : memref<64x1xf32, #tpu.memory_space<vmem>>, vector<64x1xf32>
    %3 = vector.extract_strided_slice %1 {offsets = [0, 0], sizes = [64, 1], strides = [1, 1]} : vector<64x4xf32> to vector<64x1xf32>
    %4 = vector.extract_strided_slice %0 {offsets = [0, 0], sizes = [1, 8], strides = [1, 1]} : vector<4x8xf32> to vector<1x8xf32>
    %5 = vector.broadcast %3 : vector<64x1xf32> to vector<64x8xf32>
    %6 = vector.broadcast %4 : vector<1x8xf32> to vector<64x8xf32>
    %7 = arith.mulf %5, %6 : vector<64x8xf32>
    %8 = vector.broadcast %2 : vector<64x1xf32> to vector<64x8xf32>
    %9 = arith.addf %8, %7 : vector<64x8xf32>
    %10 = vector.extract_strided_slice %1 {offsets = [0, 1], sizes = [64, 1], strides = [1, 1]} : vector<64x4xf32> to vector<64x1xf32>
    %11 = vector.extract_strided_slice %0 {offsets = [1, 0], sizes = [1, 8], strides = [1, 1]} : vector<4x8xf32> to vector<1x8xf32>
    %12 = vector.broadcast %10 : vector<64x1xf32> to vector<64x8xf32>
    %13 = vector.broadcast %11 : vector<1x8xf32> to vector<64x8xf32>
    %14 = arith.mulf %12, %13 : vector<64x8xf32>
    %15 = arith.addf %9, %14 : vector<64x8xf32>
    %16 = vector.extract_strided_slice %1 {offsets = [0, 2], sizes = [64, 1], strides = [1, 1]} : vector<64x4xf32> to vector<64x1xf32>
    %17 = vector.extract_strided_slice %0 {offsets = [2, 0], sizes = [1, 8], strides = [1, 1]} : vector<4x8xf32> to vector<1x8xf32>
    %18 = vector.broadcast %16 : vector<64x1xf32> to vector<64x8xf32>
    %19 = vector.broadcast %17 : vector<1x8xf32> to vector<64x8xf32>
    %20 = arith.mulf %18, %19 : vector<64x8xf32>
    %21 = arith.addf %15, %20 : vector<64x8xf32>
    %22 = vector.extract_strided_slice %1 {offsets = [0, 3], sizes = [64, 1], strides = [1, 1]} : vector<64x4xf32> to vector<64x1xf32>
    %23 = vector.extract_strided_slice %0 {offsets = [3, 0], sizes = [1, 8], strides = [1, 1]} : vector<4x8xf32> to vector<1x8xf32>
    %24 = vector.broadcast %22 : vector<64x1xf32> to vector<64x8xf32>
    %25 = vector.broadcast %23 : vector<1x8xf32> to vector<64x8xf32>
    %26 = arith.mulf %24, %25 : vector<64x8xf32>
    %27 = arith.addf %21, %26 : vector<64x8xf32>
    %cst = arith.constant 0.000000e+00 : f32
    %28 = vector.broadcast %cst : f32 to vector<64x8xf32>
    %29 = arith.maximumf %27, %28 : vector<64x8xf32>
    %c0_5 = arith.constant 0 : index
    %c0_6 = arith.constant 0 : index
    %30 = vector.load %arg4[%c0_5, %c0_6] : memref<64x64xbf16, #tpu.memory_space<vmem>>, vector<64x64xbf16>
    %31 = arith.truncf %29 : vector<64x8xf32> to vector<64x8xbf16>
    %cst_7 = arith.constant dense<0.000000e+00> : vector<64x8xf32>
    %32 = tpu.matmul %30, %31, %cst_7 {dimension_numbers = #tpu.dot_dimension_numbers<[1], [0], [0], [1], [0, 0, 1, 1], [], []>} : vector<64x64xbf16>, vector<64x8xbf16>, vector<64x8xf32> -> vector<64x8xf32>
    %c0_8 = arith.constant 0 : index
    %c0_9 = arith.constant 0 : index
    %33 = vector.load %arg5[%c0_8, %c0_9] : memref<64x1xf32, #tpu.memory_space<vmem>>, vector<64x1xf32>
    %34 = vector.broadcast %33 : vector<64x1xf32> to vector<64x8xf32>
    %35 = arith.addf %32, %34 : vector<64x8xf32>
    %cst_10 = arith.constant 0.000000e+00 : f32
    %36 = vector.broadcast %cst_10 : f32 to vector<64x8xf32>
    %37 = arith.maximumf %35, %36 : vector<64x8xf32>
    %c0_11 = arith.constant 0 : index
    %c0_12 = arith.constant 0 : index
    %38 = vector.load %arg6[%c0_11, %c0_12] : memref<8x64xbf16, #tpu.memory_space<vmem>>, vector<8x64xbf16>
    %39 = arith.truncf %37 : vector<64x8xf32> to vector<64x8xbf16>
    %cst_13 = arith.constant dense<0.000000e+00> : vector<8x8xf32>
    %40 = tpu.matmul %38, %39, %cst_13 {dimension_numbers = #tpu.dot_dimension_numbers<[1], [0], [0], [1], [0, 0, 1, 1], [], []>} : vector<8x64xbf16>, vector<64x8xbf16>, vector<8x8xf32> -> vector<8x8xf32>
    %c0_14 = arith.constant 0 : index
    %c0_15 = arith.constant 0 : index
    %41 = vector.load %arg7[%c0_14, %c0_15] : memref<8x1xf32, #tpu.memory_space<vmem>>, vector<8x1xf32>
    %42 = vector.broadcast %41 : vector<8x1xf32> to vector<8x8xf32>
    %43 = arith.addf %40, %42 : vector<8x8xf32>
    %c0_16 = arith.constant 0 : index
    %c0_17 = arith.constant 0 : index
    %44 = vector.load %arg8[%c0_16, %c0_17] : memref<8x8xf32, #tpu.memory_space<vmem>>, vector<8x8xf32>
    tpu.vector_store %arg8[%c0_16, %c0_17], %43 {strides = array<i32>} : memref<8x8xf32, #tpu.memory_space<vmem>>, vector<8x8xf32>,
    return
  }
  func.func @transform_0(%arg0: i32) -> (i32, i32) {
    %c0_i32 = arith.constant 0 : i32
    %c0_i32_0 = arith.constant 0 : i32
    return %c0_i32, %arg0 : i32, i32
  }
  func.func @transform_1(%arg0: i32) -> (i32, i32) {
    %c0_i32 = arith.constant 0 : i32
    %c0_i32_0 = arith.constant 0 : i32
    %c0_i32_1 = arith.constant 0 : i32
    return %c0_i32, %c0_i32_0 : i32, i32
  }
  func.func @transform_2(%arg0: i32) -> (i32, i32) {
    %c0_i32 = arith.constant 0 : i32
    %c0_i32_0 = arith.constant 0 : i32
    %c0_i32_1 = arith.constant 0 : i32
    return %c0_i32, %c0_i32_0 : i32, i32
  }
  func.func @transform_3(%arg0: i32) -> (i32, i32) {
    %c0_i32 = arith.constant 0 : i32
    %c0_i32_0 = arith.constant 0 : i32
    %c0_i32_1 = arith.constant 0 : i32
    return %c0_i32, %c0_i32_0 : i32, i32
  }
  func.func @transform_4(%arg0: i32) -> (i32, i32) {
    %c0_i32 = arith.constant 0 : i32
    %c0_i32_0 = arith.constant 0 : i32
    %c0_i32_1 = arith.constant 0 : i32
    return %c0_i32, %c0_i32_0 : i32, i32
  }
  func.func @transform_5(%arg0: i32) -> (i32, i32) {
    %c0_i32 = arith.constant 0 : i32
    %c0_i32_0 = arith.constant 0 : i32
    %c0_i32_1 = arith.constant 0 : i32
    return %c0_i32, %c0_i32_0 : i32, i32
  }
  func.func @transform_6(%arg0: i32) -> (i32, i32) {
    %c0_i32 = arith.constant 0 : i32
    %c0_i32_0 = arith.constant 0 : i32
    %c0_i32_1 = arith.constant 0 : i32
    return %c0_i32, %c0_i32_0 : i32, i32
  }
  func.func @transform_7(%arg0: i32) -> (i32, i32) {
    %c0_i32 = arith.constant 0 : i32
    %c0_i32_0 = arith.constant 0 : i32
    return %c0_i32, %arg0 : i32, i32
  }
}

</mosaic_0001>

<llo_original>
// kernel: tpu_custom_call.1
$region0: #{tpu_custom_call.1}
  #allocation0 [shape = 'u32[]', space=smem, size = 0x4, offset = 0x4, fixed_abs, tag = 'smem constant byte address 0x4 - core index']
  #allocation1 [shape = 'u32[144,128]{1,0:T(1,128)}', space=vmem, size = 0x12000, scoped, tag = 'internal scratch']
  %s0 = inlined_call_operand.vmem [shape: f32[4,8], index: 0, kind: input, shape index: {}]
  %s1 = inlined_call_operand.vmem [shape: f32[64,4], index: 1, kind: input, shape index: {}]
  %s2 = inlined_call_operand.vmem [shape: f32[64,1], index: 2, kind: input, shape index: {}]
  %s3 = inlined_call_operand.vmem [shape: bf16[64,64], index: 3, kind: input, shape index: {}]
  %s4 = inlined_call_operand.vmem [shape: f32[64,1], index: 4, kind: input, shape index: {}]
  %s5 = inlined_call_operand.vmem [shape: bf16[8,64], index: 5, kind: input, shape index: {}]
  %s6 = inlined_call_operand.vmem [shape: f32[8,1], index: 6, kind: input, shape index: {}]
  %s7 = inlined_call_operand.hbm [shape: f32[8,8], index: 7, kind: output, shape index: {}]
  %s8 = sld [smem:[#allocation0]]
  $region38: #{tpu_custom_call.1} parent=0
    _
  %s10 = ssub.s32 1, %s8
  %s11 = scalar_select 0, %s10, %s8
  $region1: #{tpu_custom_call.1} parent=0
    #allocation2 [shape = 'u8[4096]{0}', space=vmem, size = 0x1000, scoped, tag = 'output window, operand 0, single buffered']
    #allocation3 [shape = 's32[1]{0}', space=sflag, size = 0x4, scoped, tag = 'scoped memory for tpu_custom_call.1']
    %12 = vsyncpa [#allocation3], 0
    // Predicated region
    $region2: #{tpu_custom_call.1} parent=1 // pred_check
      _
    $region3: #{tpu_custom_call.1} parent=1 // pred_check_branch
      %14 = sbr.rel (0) target = $region5
    $region4: #{tpu_custom_call.1} parent=1 // pred_region
      _
    $region5: #{tpu_custom_call.1} parent=1 // pred_fallthru
      _
    // Predicated region
    $region6: #{tpu_custom_call.1} parent=1 // pred_check
      _
    $region7: #{tpu_custom_call.1} parent=1 // pred_check_branch
      %16 = sbr.rel (0) target = $region9
    $region8: #{tpu_custom_call.1} parent=1 // pred_region
      _
    $region9: #{tpu_custom_call.1} parent=1 // pred_fallthru
      _
    // Predicated region
    $region10: #{tpu_custom_call.1} parent=1 // pred_check
      _
    $region11: #{tpu_custom_call.1} parent=1 // pred_check_branch
      %18 = sbr.rel (0) target = $region13
    $region12: #{tpu_custom_call.1} parent=1 // pred_region
      _
    $region13: #{tpu_custom_call.1} parent=1 // pred_fallthru
      _
    // Predicated region
    $region14: #{tpu_custom_call.1} parent=1 // pred_check
      _
    $region15: #{tpu_custom_call.1} parent=1 // pred_check_branch
      %20 = sbr.rel (0) target = $region17
    $region16: #{tpu_custom_call.1} parent=1 // pred_region
      _
    $region17: #{tpu_custom_call.1} parent=1 // pred_fallthru
      _
    // Predicated region
    $region18: #{tpu_custom_call.1} parent=1 // pred_check
      _
    $region19: #{tpu_custom_call.1} parent=1 // pred_check_branch
      %22 = sbr.rel (0) target = $region21
    $region20: #{tpu_custom_call.1} parent=1 // pred_region
      _
    $region21: #{tpu_custom_call.1} parent=1 // pred_fallthru
      _
    // Predicated region
    $region22: #{tpu_custom_call.1} parent=1 // pred_check
      _
    $region23: #{tpu_custom_call.1} parent=1 // pred_check_branch
      %24 = sbr.rel (0) target = $region25
    $region24: #{tpu_custom_call.1} parent=1 // pred_region
      _
    $region25: #{tpu_custom_call.1} parent=1 // pred_fallthru
      _
    // Predicated region
    $region26: #{tpu_custom_call.1} parent=1 // pred_check
      _
    $region27: #{tpu_custom_call.1} parent=1 // pred_check_branch
      %26 = sbr.rel (0) target = $region29
    $region28: #{tpu_custom_call.1} parent=1 // pred_region
      _
    $region29: #{tpu_custom_call.1} parent=1 // pred_fallthru
      _
    %v28 = vld [vmem:[%s0] sm:$0xf]
    %v29 = vld [vmem:[%s1] sm:$0xff]
    %v30 = vld [vmem:[%s1 + $0x8] sm:$0xff]
    %v31 = vld [vmem:[%s1 + $0x10] sm:$0xff]
    %v32 = vld [vmem:[%s1 + $0x18] sm:$0xff]
    %v33 = vld [vmem:[%s1 + $0x20] sm:$0xff]
    %v34 = vld [vmem:[%s1 + $0x28] sm:$0xff]
    %v35 = vld [vmem:[%s1 + $0x30] sm:$0xff]
    %v36 = vld [vmem:[%s1 + $0x38] sm:$0xff]
    %v37 = vld [vmem:[%s2] sm:$0xff]
    %v38 = vld [vmem:[%s2 + $0x8] sm:$0xff]
    %v39 = vld [vmem:[%s2 + $0x10] sm:$0xff]
    %v40 = vld [vmem:[%s2 + $0x18] sm:$0xff]
    %v41 = vld [vmem:[%s2 + $0x20] sm:$0xff]
    %v42 = vld [vmem:[%s2 + $0x28] sm:$0xff]
    %v43 = vld [vmem:[%s2 + $0x30] sm:$0xff]
    %v44 = vld [vmem:[%s2 + $0x38] sm:$0xff]
    %46 = vset.pattern.permute.xlu0 0
    %47 = vperm.xlu0 %46, %v29
    %v48 = vpop.permute.xlu0 %47
    %51 = vset.pattern.permute.xlu0 0
    %52 = vperm.xlu0 %51, %v30
    %v53 = vpop.permute.xlu0 %52
    %56 = vset.pattern.permute.xlu0 0
    %57 = vperm.xlu0 %56, %v31
    %v58 = vpop.permute.xlu0 %57
    %61 = vset.pattern.permute.xlu0 0
    %62 = vperm.xlu0 %61, %v32
    %v63 = vpop.permute.xlu0 %62
    %66 = vset.pattern.permute.xlu0 0
    %67 = vperm.xlu0 %66, %v33
    %v68 = vpop.permute.xlu0 %67
    %71 = vset.pattern.permute.xlu0 0
    %72 = vperm.xlu0 %71, %v34
    %v73 = vpop.permute.xlu0 %72
    %76 = vset.pattern.permute.xlu0 0
    %77 = vperm.xlu0 %76, %v35
    %v78 = vpop.permute.xlu0 %77
    %81 = vset.pattern.permute.xlu0 0
    %82 = vperm.xlu0 %81, %v36
    %v83 = vpop.permute.xlu0 %82
    %v85 = vlaneseq
    %v86 = vshrl.u32 %v85, 7
    %v87 = vsub.s32 0, %v86
    %v88 = vrot.slane %v28, %v87
    %v89 = vmul.f32 %v48, %v88
    %v90 = vmul.f32 %v53, %v88
    %v91 = vmul.f32 %v58, %v88
    %v92 = vmul.f32 %v63, %v88
    %v93 = vmul.f32 %v68, %v88
    %v94 = vmul.f32 %v73, %v88
    %v95 = vmul.f32 %v78, %v88
    %v96 = vmul.f32 %v83, %v88
    %98 = vset.pattern.permute.xlu0 0
    %99 = vperm.xlu0 %98, %v37
    %v100 = vpop.permute.xlu0 %99
    %103 = vset.pattern.permute.xlu0 0
    %104 = vperm.xlu0 %103, %v38
    %v105 = vpop.permute.xlu0 %104
    %108 = vset.pattern.permute.xlu0 0
    %109 = vperm.xlu0 %108, %v39
    %v110 = vpop.permute.xlu0 %109
    %113 = vset.pattern.permute.xlu0 0
    %114 = vperm.xlu0 %113, %v40
    %v115 = vpop.permute.xlu0 %114
    %118 = vset.pattern.permute.xlu0 0
    %119 = vperm.xlu0 %118, %v41
    %v120 = vpop.permute.xlu0 %119
    %123 = vset.pattern.permute.xlu0 0
    %124 = vperm.xlu0 %123, %v42
    %v125 = vpop.permute.xlu0 %124
    %128 = vset.pattern.permute.xlu0 0
    %129 = vperm.xlu0 %128, %v43
    %v130 = vpop.permute.xlu0 %129
    %133 = vset.pattern.permute.xlu0 0
    %134 = vperm.xlu0 %133, %v44
    %v135 = vpop.permute.xlu0 %134
    %v137 = vadd.f32 %v100, %v89
    %v138 = vadd.f32 %v105, %v90
    %v139 = vadd.f32 %v110, %v91
    %v140 = vadd.f32 %v115, %v92
    %v141 = vadd.f32 %v120, %v93
    %v142 = vadd.f32 %v125, %v94
    %v143 = vadd.f32 %v130, %v95
    %v144 = vadd.f32 %v135, %v96
    %145 = vset.pattern.permute.xlu0 1
    %146 = vperm.xlu0 %145, %v29
    %v147 = vpop.permute.xlu0 %146
    %149 = vset.pattern.permute.xlu0 1
    %150 = vperm.xlu0 %149, %v30
    %v151 = vpop.permute.xlu0 %150
    %153 = vset.pattern.permute.xlu0 1
    %154 = vperm.xlu0 %153, %v31
    %v155 = vpop.permute.xlu0 %154
    %157 = vset.pattern.permute.xlu0 1
    %158 = vperm.xlu0 %157, %v32
    %v159 = vpop.permute.xlu0 %158
    %161 = vset.pattern.permute.xlu0 1
    %162 = vperm.xlu0 %161, %v33
    %v163 = vpop.permute.xlu0 %162
    %165 = vset.pattern.permute.xlu0 1
    %166 = vperm.xlu0 %165, %v34
    %v167 = vpop.permute.xlu0 %166
    %169 = vset.pattern.permute.xlu0 1
    %170 = vperm.xlu0 %169, %v35
    %v171 = vpop.permute.xlu0 %170
    %173 = vset.pattern.permute.xlu0 1
    %174 = vperm.xlu0 %173, %v36
    %v175 = vpop.permute.xlu0 %174
    %v177 = vlaneseq
    %v178 = vshrl.u32 %v177, 7
    %v179 = vsub.s32 1, %v178
    %v180 = vrot.slane %v28, %v179
    %v181 = vmul.f32 %v147, %v180
    %v182 = vmul.f32 %v151, %v180
    %v183 = vmul.f32 %v155, %v180
    %v184 = vmul.f32 %v159, %v180
    %v185 = vmul.f32 %v163, %v180
    %v186 = vmul.f32 %v167, %v180
    %v187 = vmul.f32 %v171, %v180
    %v188 = vmul.f32 %v175, %v180
    %v189 = vadd.f32 %v137, %v181
    %v190 = vadd.f32 %v138, %v182
    %v191 = vadd.f32 %v139, %v183
    %v192 = vadd.f32 %v140, %v184
    %v193 = vadd.f32 %v141, %v185
    %v194 = vadd.f32 %v142, %v186
    %v195 = vadd.f32 %v143, %v187
    %v196 = vadd.f32 %v144, %v188
    %197 = vset.pattern.permute.xlu0 2
    %198 = vperm.xlu0 %197, %v29
    %v199 = vpop.permute.xlu0 %198
    %201 = vset.pattern.permute.xlu0 2
    %202 = vperm.xlu0 %201, %v30
    %v203 = vpop.permute.xlu0 %202
    %205 = vset.pattern.permute.xlu0 2
    %206 = vperm.xlu0 %205, %v31
    %v207 = vpop.permute.xlu0 %206
    %209 = vset.pattern.permute.xlu0 2
    %210 = vperm.xlu0 %209, %v32
    %v211 = vpop.permute.xlu0 %210
    %213 = vset.pattern.permute.xlu0 2
    %214 = vperm.xlu0 %213, %v33
    %v215 = vpop.permute.xlu0 %214
    %217 = vset.pattern.permute.xlu0 2
    %218 = vperm.xlu0 %217, %v34
    %v219 = vpop.permute.xlu0 %218
    %221 = vset.pattern.permute.xlu0 2
    %222 = vperm.xlu0 %221, %v35
    %v223 = vpop.permute.xlu0 %222
    %225 = vset.pattern.permute.xlu0 2
    %226 = vperm.xlu0 %225, %v36
    %v227 = vpop.permute.xlu0 %226
    %v229 = vlaneseq
    %v230 = vshrl.u32 %v229, 7
    %v231 = vsub.s32 2, %v230
    %v232 = vrot.slane %v28, %v231
    %v233 = vmul.f32 %v199, %v232
    %v234 = vmul.f32 %v203, %v232
    %v235 = vmul.f32 %v207, %v232
    %v236 = vmul.f32 %v211, %v232
    %v237 = vmul.f32 %v215, %v232
    %v238 = vmul.f32 %v219, %v232
    %v239 = vmul.f32 %v223, %v232
    %v240 = vmul.f32 %v227, %v232
    %v241 = vadd.f32 %v189, %v233
    %v242 = vadd.f32 %v190, %v234
    %v243 = vadd.f32 %v191, %v235
    %v244 = vadd.f32 %v192, %v236
    %v245 = vadd.f32 %v193, %v237
    %v246 = vadd.f32 %v194, %v238
    %v247 = vadd.f32 %v195, %v239
    %v248 = vadd.f32 %v196, %v240
    %249 = vset.pattern.permute.xlu0 3
    %250 = vperm.xlu0 %249, %v29
    %v251 = vpop.permute.xlu0 %250
    %253 = vset.pattern.permute.xlu0 3
    %254 = vperm.xlu0 %253, %v30
    %v255 = vpop.permute.xlu0 %254
    %257 = vset.pattern.permute.xlu0 3
    %258 = vperm.xlu0 %257, %v31
    %v259 = vpop.permute.xlu0 %258
    %261 = vset.pattern.permute.xlu0 3
    %262 = vperm.xlu0 %261, %v32
    %v263 = vpop.permute.xlu0 %262
    %265 = vset.pattern.permute.xlu0 3
    %266 = vperm.xlu0 %265, %v33
    %v267 = vpop.permute.xlu0 %266
    %269 = vset.pattern.permute.xlu0 3
    %270 = vperm.xlu0 %269, %v34
    %v271 = vpop.permute.xlu0 %270
    %273 = vset.pattern.permute.xlu0 3
    %274 = vperm.xlu0 %273, %v35
    %v275 = vpop.permute.xlu0 %274
    %277 = vset.pattern.permute.xlu0 3
    %278 = vperm.xlu0 %277, %v36
    %v279 = vpop.permute.xlu0 %278
    %v281 = vlaneseq
    %v282 = vshrl.u32 %v281, 7
    %v283 = vsub.s32 3, %v282
    %v284 = vrot.slane %v28, %v283
    %v285 = vmul.f32 %v251, %v284
    %v286 = vmul.f32 %v255, %v284
    %v287 = vmul.f32 %v259, %v284
    %v288 = vmul.f32 %v263, %v284
    %v289 = vmul.f32 %v267, %v284
    %v290 = vmul.f32 %v271, %v284
    %v291 = vmul.f32 %v275, %v284
    %v292 = vmul.f32 %v279, %v284
    %v293 = vadd.f32 %v241, %v285
    %v294 = vadd.f32 %v242, %v286
    %v295 = vadd.f32 %v243, %v287
    %v296 = vadd.f32 %v244, %v288
    %v297 = vadd.f32 %v245, %v289
    %v298 = vadd.f32 %v246, %v290
    %v299 = vadd.f32 %v247, %v291
    %v300 = vadd.f32 %v248, %v292
    %v301 = vmax.f32 %v293, 0.0
    %v302 = vmax.f32 %v294, 0.0
    %v303 = vmax.f32 %v295, 0.0
    %v304 = vmax.f32 %v296, 0.0
    %v305 = vmax.f32 %v297, 0.0
    %v306 = vmax.f32 %v298, 0.0
    %v307 = vmax.f32 %v299, 0.0
    %v308 = vmax.f32 %v300, 0.0
    %v309 = vld [vmem:[%s3] sm:$0xf]
    %v310 = vld [vmem:[%s3 + $0x4] sm:$0xf]
    %v311 = vld [vmem:[%s3 + $0x8] sm:$0xf]
    %v312 = vld [vmem:[%s3 + $0xc] sm:$0xf]
    %v313 = vld [vmem:[%s3 + $0x10] sm:$0xf]
    %v314 = vld [vmem:[%s3 + $0x14] sm:$0xf]
    %v315 = vld [vmem:[%s3 + $0x18] sm:$0xf]
    %v316 = vld [vmem:[%s3 + $0x1c] sm:$0xf]
    %v317 = vpack.c.bf16 %v302, %v301
    %v318 = vpack.c.bf16 %v304, %v303
    %v319 = vpack.c.bf16 %v306, %v305
    %v320 = vpack.c.bf16 %v308, %v307
    %v321 = vld [vmem:[%s4] sm:$0xff]
    %v322 = vld [vmem:[%s4 + $0x8] sm:$0xff]
    %v323 = vld [vmem:[%s4 + $0x10] sm:$0xff]
    %v324 = vld [vmem:[%s4 + $0x18] sm:$0xff]
    %v325 = vld [vmem:[%s4 + $0x20] sm:$0xff]
    %v326 = vld [vmem:[%s4 + $0x28] sm:$0xff]
    %v327 = vld [vmem:[%s4 + $0x30] sm:$0xff]
    %v328 = vld [vmem:[%s4 + $0x38] sm:$0xff]
    %330 = vset.pattern.permute.xlu0 0
    %331 = vperm.xlu0 %330, %v321
    %v332 = vpop.permute.xlu0 %331
    %335 = vset.pattern.permute.xlu0 0
    %336 = vperm.xlu0 %335, %v322
    %v337 = vpop.permute.xlu0 %336
    %340 = vset.pattern.permute.xlu0 0
    %341 = vperm.xlu0 %340, %v323
    %v342 = vpop.permute.xlu0 %341
    %345 = vset.pattern.permute.xlu0 0
    %346 = vperm.xlu0 %345, %v324
    %v347 = vpop.permute.xlu0 %346
    %350 = vset.pattern.permute.xlu0 0
    %351 = vperm.xlu0 %350, %v325
    %v352 = vpop.permute.xlu0 %351
    %355 = vset.pattern.permute.xlu0 0
    %356 = vperm.xlu0 %355, %v326
    %v357 = vpop.permute.xlu0 %356
    %360 = vset.pattern.permute.xlu0 0
    %361 = vperm.xlu0 %360, %v327
    %v362 = vpop.permute.xlu0 %361
    %365 = vset.pattern.permute.xlu0 0
    %366 = vperm.xlu0 %365, %v328
    %v367 = vpop.permute.xlu0 %366
    %v377 = vunpack.c.l.b16 %v309
    %v378 = vunpack.c.l.b16 %v310
    %v379 = vunpack.c.l.b16 %v311
    %v380 = vunpack.c.l.b16 %v312
    %v381 = vunpack.c.l.b16 %v313
    %v382 = vunpack.c.l.b16 %v314
    %v383 = vunpack.c.l.b16 %v315
    %v384 = vunpack.c.l.b16 %v316
    %v385 = vpack.c.b16 %v378, %v377
    %v386 = vpack.c.b16 %v380, %v379
    %v387 = vpack.c.b16 %v382, %v381
    %v388 = vpack.c.b16 %v384, %v383
    %vm389 = vcmask 523264
    %v391 = vsel %vm389, %v385, 0
    %v394 = vsel %vm389, %v386, 0
    %v397 = vsel %vm389, %v387, 0
    %v400 = vsel %vm389, %v388, 0
    %402 = vmatprep.subr.bf16.mxu0 0
    %403 = vmatpush1.bf16.msra.mxu0 %v317
    %404 = vmatprep.subr.bf16.mxu0 0
    %405 = vmatpush1.bf16.msra.mxu0 %v318
    %406 = vmatprep.subr.bf16.mxu0 0
    %407 = vmatpush1.bf16.msra.mxu0 %v319
    %408 = vmatprep.subr.bf16.mxu0 0
    %409 = vmatpush1.bf16.msra.mxu0 %v320
    %410 = vmatprep.subr.bf16.mxu0 0
    %411 = vmatpush1.bf16.msra.mxu0 0
    %412 = vmatprep.subr.bf16.mxu0 0
    %413 = vmatpush1.bf16.msra.mxu0 0
    %414 = vmatprep.subr.bf16.mxu0 0
    %415 = vmatpush1.bf16.msra.mxu0 0
    %416 = vmatprep.subr.bf16.mxu0 0
    %417 = vmatpush1.bf16.msra.mxu0 0
    %418 = vmatprep.subr.bf16.mxu0 0
    %419 = vmatpush1.bf16.msra.mxu0 0
    %420 = vmatprep.subr.bf16.mxu0 0
    %421 = vmatpush1.bf16.msra.mxu0 0
    %422 = vmatprep.subr.bf16.mxu0 0
    %423 = vmatpush1.bf16.msra.mxu0 0
    %424 = vmatprep.subr.bf16.mxu0 0
    %425 = vmatpush1.bf16.msra.mxu0 0
    %426 = vmatprep.subr.bf16.mxu0 0
    %427 = vmatpush1.bf16.msra.mxu0 0
    %428 = vmatprep.subr.bf16.mxu0 0
    %429 = vmatpush1.bf16.msra.mxu0 0
    %430 = vmatprep.subr.bf16.mxu0 0
    %431 = vmatpush1.bf16.msra.mxu0 0
    %432 = vmatprep.subr.bf16.mxu0 0
    %433 = vmatpush1.bf16.msra.mxu0 0
    %434 = vmatprep.mubr.bf16.mxu0 0
    %435 = vmatmul.mubr.bf16.gmra.mrb[0].mxu0 %v391
    %v436 = vpop.f32.mrb[0].mxu0
    %v437 = vadd.f32 %v332, %v436
    %v438 = vpop.f32.mrb[0].mxu0
    %v439 = vpop.f32.mrb[0].mxu0
    %v440 = vadd.f32 %v337, %v439
    %v441 = vpop.f32.mrb[0].mxu0
    %442 = vmatprep.mubr.bf16.mxu0 0
    %443 = vmatmul.mubr.bf16.gmra.mrb[0].mxu0 %v394
    %v444 = vpop.f32.mrb[0].mxu0
    %v445 = vadd.f32 %v342, %v444
    %v446 = vpop.f32.mrb[0].mxu0
    %v447 = vpop.f32.mrb[0].mxu0
    %v448 = vadd.f32 %v347, %v447
    %v449 = vpop.f32.mrb[0].mxu0
    %450 = vmatprep.mubr.bf16.mxu0 0
    %451 = vmatmul.mubr.bf16.gmra.mrb[0].mxu0 %v397
    %v452 = vpop.f32.mrb[0].mxu0
    %v453 = vadd.f32 %v352, %v452
    %v454 = vpop.f32.mrb[0].mxu0
    %v455 = vpop.f32.mrb[0].mxu0
    %v456 = vadd.f32 %v357, %v455
    %v457 = vpop.f32.mrb[0].mxu0
    %458 = vmatprep.mubr.bf16.mxu0 0
    %459 = vmatmul.mubr.bf16.gmra.mrb[0].mxu0 %v400
    %v460 = vpop.f32.mrb[0].mxu0
    %v461 = vadd.f32 %v362, %v460
    %v462 = vpop.f32.mrb[0].mxu0
    %v463 = vpop.f32.mrb[0].mxu0
    %v464 = vadd.f32 %v367, %v463
    %v465 = vpop.f32.mrb[0].mxu0
    %466 = vdwg.mxu0
    %v467 = vmax.f32 %v437, 0.0
    %v468 = vmax.f32 %v440, 0.0
    %v469 = vmax.f32 %v445, 0.0
    %v470 = vmax.f32 %v448, 0.0
    %v471 = vmax.f32 %v453, 0.0
    %v472 = vmax.f32 %v456, 0.0
    %v473 = vmax.f32 %v461, 0.0
    %v474 = vmax.f32 %v464, 0.0
    %v475 = vld [vmem:[%s5] sm:$0xf]
    %v476 = vpack.c.bf16 %v468, %v467
    %v477 = vpack.c.bf16 %v470, %v469
    %v478 = vpack.c.bf16 %v472, %v471
    %v479 = vpack.c.bf16 %v474, %v473
    %v480 = vld [vmem:[%s6] sm:$0xff]
    %482 = vset.pattern.permute.xlu0 0
    %483 = vperm.xlu0 %482, %v480
    %v484 = vpop.permute.xlu0 %483
    %v487 = vsel %vm389, %v475, 0
    %489 = vmatprep.subr.bf16.mxu0 0
    %490 = vmatpush1.bf16.msra.mxu0 %v476
    %491 = vmatprep.subr.bf16.mxu0 0
    %492 = vmatpush1.bf16.msra.mxu0 %v477
    %493 = vmatprep.subr.bf16.mxu0 0
    %494 = vmatpush1.bf16.msra.mxu0 %v478
    %495 = vmatprep.subr.bf16.mxu0 0
    %496 = vmatpush1.bf16.msra.mxu0 %v479
    %497 = vmatprep.subr.bf16.mxu0 0
    %498 = vmatpush1.bf16.msra.mxu0 0
    %499 = vmatprep.subr.bf16.mxu0 0
    %500 = vmatpush1.bf16.msra.mxu0 0
    %501 = vmatprep.subr.bf16.mxu0 0
    %502 = vmatpush1.bf16.msra.mxu0 0
    %503 = vmatprep.subr.bf16.mxu0 0
    %504 = vmatpush1.bf16.msra.mxu0 0
    %505 = vmatprep.subr.bf16.mxu0 0
    %506 = vmatpush1.bf16.msra.mxu0 0
    %507 = vmatprep.subr.bf16.mxu0 0
    %508 = vmatpush1.bf16.msra.mxu0 0
    %509 = vmatprep.subr.bf16.mxu0 0
    %510 = vmatpush1.bf16.msra.mxu0 0
    %511 = vmatprep.subr.bf16.mxu0 0
    %512 = vmatpush1.bf16.msra.mxu0 0
    %513 = vmatprep.subr.bf16.mxu0 0
    %514 = vmatpush1.bf16.msra.mxu0 0
    %515 = vmatprep.subr.bf16.mxu0 0
    %516 = vmatpush1.bf16.msra.mxu0 0
    %517 = vmatprep.subr.bf16.mxu0 0
    %518 = vmatpush1.bf16.msra.mxu0 0
    %519 = vmatprep.subr.bf16.mxu0 0
    %520 = vmatpush1.bf16.msra.mxu0 0
    %521 = vmatprep.mubr.bf16.mxu0 0
    %522 = vmatmul.mubr.bf16.gmra.mrb[0].mxu0 %v487
    %v523 = vpop.f32.mrb[0].mxu0
    %v524 = vadd.f32 %v484, %v523
    %v525 = vpop.f32.mrb[0].mxu0
    %v526 = vpop.f32.mrb[0].mxu0
    %v527 = vpop.f32.mrb[0].mxu0
    %528 = vdwg.mxu0
    %vm529 = vcmask 64512
    %530 = vst.msk [vmem:[#allocation2] sm:$0xff] %vm529, %v524
    // Predicated region
    $region30: #{tpu_custom_call.1} parent=1 // pred_check
      _
    $region31: #{tpu_custom_call.1} parent=1 // pred_check_branch
      %532 = sbr.rel (0) target = $region33
    $region32: #{tpu_custom_call.1} parent=1 // pred_region
      %s534 = ssub.s32 128, 128
      %535 = vsyncadd [#allocation3], %s534
      %s537 = sshll.u32 [#allocation2], 4
      %s538 = int_to_ptr.vmem [resolvable:$true] %s537
      %540 = dma.vmem_to_hbm [thread:$0]  %s538, 128, %s7, [#allocation3]
    $region33: #{tpu_custom_call.1} parent=1 // pred_fallthru
      _
    // Predicated region
    $region34: #{tpu_custom_call.1} parent=1 // pred_check
      _
    $region35: #{tpu_custom_call.1} parent=1 // pred_check_branch
      %542 = sbr.rel (0) target = $region37
    $region36: #{tpu_custom_call.1} parent=1 // pred_region
      %543 = dma.done [#allocation3], 128
    $region37: #{tpu_custom_call.1} parent=1 // pred_fallthru
      _
    %544 = vsyncpa [#allocation3], 1

</llo_original>
